<compile_context>
chip_gen: v5e
topology: v5e:2x2
jax: 0.10.0
libtpu: 0.0.40
codegen_flags: <defaults>
</compile_context>

<pallas_src>
import functools

import jax
import jax.numpy as jnp
from jax.experimental import pallas as pl
from jax.experimental.pallas import tpu as pltpu


def _sct_tile_kernel(xn_ref, xnt_ref, lab_row_ref, lab_col_ref,
                     tval_ref, tidx_ref, part_ref, *, semi):
    """One row tile: mine hardest pos/neg over all N columns, emit per-row
    Pos/Neg/I_pos/I_neg and this tile's 7 scalar partial sums."""
    f32 = jnp.float32
    tm = xn_ref.shape[0]
    n = xnt_ref.shape[1]
    pid = pl.program_id(0)
    row_base = pid * tm

    # cos = lhs @ rhs with rhs already transposed to (D, N): native MXU matmul,
    # f32 accumulation (operands may be bf16 when compute_dtype=bfloat16).
    cos = jnp.dot(xn_ref[...], xnt_ref[...],
                  preferred_element_type=f32)                           # (TM, N)

    col_j = jax.lax.broadcasted_iota(jnp.int32, (tm, n), 1)             # (TM, N)
    row_ids = row_base + jax.lax.broadcasted_iota(jnp.int32, (tm, 1), 0)
    cos = jnp.where(col_j == row_ids, -1.0, cos)                        # fill_diagonal_(-1)

    eq = lab_col_ref[...] == lab_row_ref[...]                           # (TM, N)
    diff = jnp.logical_not(eq)
    big_idx = jnp.int32(n)

    # --- hardest positive: D_detach_P (Diff -> -1, >0.9999 -> -1) fused ---
    dP = jnp.where(diff | (cos > 0.9999), -1.0, cos)
    v_pos = jnp.max(dP, axis=1, keepdims=True)                          # (TM, 1)
    i_pos = jnp.min(jnp.where(dP == v_pos, col_j, big_idx),
                    axis=1, keepdims=True)                              # first argmax
    # CosSim[i, I_pos]: == v_pos when the max wasn't an overwritten -1; otherwise
    # every dP entry is -1, first argmax is column 0 -> cos[:, 0].
    pos = jnp.where(v_pos > -1.0, v_pos, cos[:, 0:1])
    mask_pos_valid = (v_pos > -1.0) & (v_pos < 1.0)

    # --- hardest negative: D_detach_N ('Same' mask redundant: diag already -1) ---
    dN = jnp.where(eq, -1.0, cos)
    if semi:                                                            # 'shn' mining
        dN = jnp.where((dN > v_pos) & diff, -1.0, dN)
    v_neg = jnp.max(dN, axis=1, keepdims=True)
    i_neg = jnp.min(jnp.where(dN == v_neg, col_j, big_idx),
                    axis=1, keepdims=True)
    neg = jnp.where(v_neg > -1.0, v_neg, cos[:, 0:1])
    mask_neg_valid = (v_neg > -1.0) & (v_neg < 1.0)

    mask_valid = mask_pos_valid & mask_neg_valid
    hard_mask = ((neg > pos) | (neg > 0.8)) & mask_valid
    easy_mask = (neg < pos) & (neg < 0.8) & mask_valid

    # --- -log_softmax([Pos, Neg] / 0.1, dim=1)[:, 0] ---
    p_s = pos / 0.1
    n_s = neg / 0.1
    m = jnp.maximum(p_s, n_s)
    nll0 = m + jnp.log(jnp.exp(p_s - m) + jnp.exp(n_s - m)) - p_s       # (TM, 1)

    # --- per-row outputs: two narrow column stores into the lane-dense block
    #     (wrapper slices [:, :2]; HBM writeback stays full-width 128 lanes) ---
    tval_ref[:, 0:1] = pos.astype(tval_ref.dtype)
    tval_ref[:, 1:2] = neg.astype(tval_ref.dtype)
    tidx_ref[:, 0:1] = i_pos
    tidx_ref[:, 1:2] = i_neg

    # --- this tile's 7 scalar partial sums, packed on sublanes 0..6 of a single
    #     (8, 128) output block (reduced across tiles in the wrapper) ---
    s_hard = jnp.sum(jnp.where(hard_mask, neg, 0.0), keepdims=True)
    n_hard = jnp.sum(hard_mask.astype(f32), keepdims=True)
    s_easy = jnp.sum(jnp.where(easy_mask, nll0, 0.0), keepdims=True)
    n_easy = jnp.sum(easy_mask.astype(f32), keepdims=True)
    s_nllv = jnp.sum(jnp.where(mask_valid, nll0, 0.0), keepdims=True)
    n_valid = jnp.sum(mask_valid.astype(f32), keepdims=True)
    n_hn = jnp.sum(((neg > pos) & mask_valid).astype(f32), keepdims=True)

    sub = jax.lax.broadcasted_iota(jnp.int32, (8, 128), 0)
    block = jnp.zeros((8, 128), f32)
    for k, v in enumerate((s_hard, n_hard, s_easy, n_easy, s_nllv, n_valid, n_hn)):
        block = jnp.where(sub == k, v, block)
    part_ref[...] = block[None, :, :]


def _vmem_capacity_bytes():
    try:
        return int(pltpu.get_tpu_info().vmem_capacity_bytes)
    except Exception:
        return 64 * (1 << 20)   # conservative (v7x-sized) fallback


def _pick_tm(n, d, cbytes, vmem_cap):
    """Largest convenient row tile dividing N; generation-aware temp budget."""
    tm = n
    for cand in (512, 256, 128, 64, 32, 16, 8):
        if cand <= n and n % cand == 0:
            tm = cand
            break
    # ~12 MiB of (TM, N) temporaries on 64 MiB VMEM (v7x), ~32 MiB on 128 MiB
    # parts (v5e/v6e); never shrink below 128 rows (MXU feed / step overhead).
    budget = 12 * (1 << 20) if vmem_cap <= 64 * (1 << 20) else 32 * (1 << 20)
    while (tm > 128 and n % (tm // 2) == 0
           and 12 * tm * n * 4 + 2 * n * d * cbytes > budget):
        tm //= 2
    return tm


def sct_loss(fvec, labels, method="sct", lam=1.0, tile_rows=None,
             compute_dtype=None):
    """Pallas implementation of SCTLoss.forward.

    Returns (loss, Triplet_val (N,2) f32, Triplet_idx (N,2) int32, hn_ratio).
    compute_dtype=jnp.bfloat16 feeds the MXU at native rate (f32 accumulation);
    default keeps fvec.dtype for exact parity with the f32 reference.
    """
    N, D = fvec.shape
    if compute_dtype is None:
        compute_dtype = fvec.dtype
    cbytes = jnp.dtype(compute_dtype).itemsize
    cap = _vmem_capacity_bytes()
    tm = _pick_tm(N, D, cbytes, cap) if tile_rows is None else int(tile_rows)
    assert N % tm == 0, (N, tm)
    n_tiles = N // tm

    # Pre-normalize (F.normalize eps) and pre-transpose in the wrapper: O(N*D),
    # memory-bound, negligible next to the O(N^2*D) kernel.
    x = fvec.astype(jnp.float32)
    xn = x / jnp.maximum(jnp.linalg.norm(x, axis=1, keepdims=True), 1e-12)
    xn = xn.astype(compute_dtype)
    xnt = xn.T                                           # (D, N) resident RHS
    lab_row = labels.reshape(1, N).astype(jnp.int32)
    lab_col = labels.reshape(N, 1).astype(jnp.int32)

    kernel = functools.partial(_sct_tile_kernel, semi=(method == "shn"))

    # VMEM budget: resident (D,N) RHS (double-buffered) + per-tile LHS blocks +
    # ~12 live (TM,N) f32 temporaries + padded per-row output blocks + slack.
    est = (2 * N * D * cbytes + 2 * tm * D * cbytes + 12 * tm * N * 4
           + 2 * tm * 128 * 8 + 2 * 8 * 128 * 4 + 2 * (N + tm) * 4 + (2 << 20))
    vmem_limit = int(min(max(est, 16 * (1 << 20)), int(0.8 * cap)))

    out_shape = (
        jax.ShapeDtypeStruct((N, 128), jnp.float32),        # Triplet_val (padded)
        jax.ShapeDtypeStruct((N, 128), jnp.int32),          # Triplet_idx (padded)
        jax.ShapeDtypeStruct((n_tiles, 8, 128), jnp.float32),  # per-tile partials
    )

    grid_spec = pltpu.PrefetchScalarGridSpec(
        num_scalar_prefetch=0,
        grid=(n_tiles,),
        in_specs=[
            pl.BlockSpec((tm, D), lambda i: (i, 0)),     # LHS rows for this tile
            pl.BlockSpec((D, N), lambda i: (0, 0)),      # pre-transposed RHS, resident
            pl.BlockSpec((1, N), lambda i: (0, 0)),      # labels as a row
            pl.BlockSpec((tm, 1), lambda i: (i, 0)),     # labels for this row tile
        ],
        out_specs=(
            pl.BlockSpec((tm, 128), lambda i: (i, 0)),
            pl.BlockSpec((tm, 128), lambda i: (i, 0)),
            pl.BlockSpec((1, 8, 128), lambda i: (i, 0, 0)),
        ),
    )

    tval_pad, tidx_pad, partials = pl.pallas_call(
        kernel,
        out_shape=out_shape,
        grid_spec=grid_spec,
        compiler_params=pltpu.CompilerParams(
            dimension_semantics=("parallel",),           # no cross-tile state
            vmem_limit_bytes=vmem_limit,
        ),
    )(xn, xnt, lab_row, lab_col)

    # --- tiny final reduction + loss / hn_ratio formulas (wrapper-side JAX) ---
    stats = jnp.sum(partials[:, :, 0], axis=0)           # (8,)
    s_hard, n_hard = stats[0], stats[1]
    s_easy, n_easy = stats[2], stats[3]
    s_nllv, n_valid = stats[4], stats[5]
    n_hn = stats[6]

    hn_ratio = n_hn / n_valid                            # NaN if no valid (matches ref)
    if method == "sct":
        bad_h = jnp.isnan(s_hard) | (n_hard == 0.0)
        sh = jnp.where(bad_h, 0.0, s_hard)
        nh = jnp.where(bad_h, 0.0, n_hard)
        bad_e = jnp.isnan(s_easy) | (n_easy == 0.0)
        se = jnp.where(bad_e, 0.0, s_easy)
        ne = jnp.where(bad_e, 0.0, n_easy)
        n_tot = jnp.where(ne + nh == 0.0, 1.0, ne + nh)
        loss = (se + lam * sh) / n_tot
    else:
        loss = s_nllv / n_valid

    return loss, tval_pad[:, :2], tidx_pad[:, :2], hn_ratio


def _reference(fvec, labels, method="sct", lam=1.0):
    """Pure-JAX mirror of the PyTorch forward, for correctness checking."""
    N, _ = fvec.shape
    x = fvec.astype(jnp.float32)
    xn = x / jnp.maximum(jnp.linalg.norm(x, axis=1, keepdims=True), 1e-12)
    cos = xn @ xn.T
    cos = cos.at[jnp.arange(N), jnp.arange(N)].set(-1.0)
    eq = labels[:, None] == labels[None, :]
    same = eq & ~jnp.eye(N, dtype=bool)
    diff = ~eq
    dP = jnp.where(diff, -1.0, cos)
    dP = jnp.where(dP > 0.9999, -1.0, dP)
    v_pos = dP.max(axis=1)
    i_pos = jnp.argmax(dP, axis=1)
    pos = cos[jnp.arange(N), i_pos]
    mpv = (v_pos > -1) & (v_pos < 1)
    dN = jnp.where(same, -1.0, cos)
    if method == "shn":
        dN = jnp.where((dN > v_pos[:, None]) & diff, -1.0, dN)
    v_neg = dN.max(axis=1)
    i_neg = jnp.argmax(dN, axis=1)
    neg = cos[jnp.arange(N), i_neg]
    mnv = (v_neg > -1) & (v_neg < 1)
    mv = mpv & mnv
    hard = ((neg > pos) | (neg > 0.8)) & mv
    easy = (neg < pos) & (neg < 0.8) & mv
    hn_ratio = (jnp.sum(((neg > pos) & mv).astype(jnp.float32))
                / jnp.sum(mv.astype(jnp.float32)))
    tval = jnp.stack([pos, neg], axis=1)
    tidx = jnp.stack([i_pos, i_neg], axis=1).astype(jnp.int32)
    logits = tval / 0.1
    nll0 = jax.nn.logsumexp(logits, axis=1) - logits[:, 0]
    if method == "sct":
        lh = jnp.sum(jnp.where(hard, neg, 0.0))
        le = jnp.sum(jnp.where(easy, nll0, 0.0))
        nh = jnp.sum(hard.astype(jnp.float32))
        ne = jnp.sum(easy.astype(jnp.float32))
        lh = jnp.where(nh == 0, 0.0, lh)
        nh = jnp.where(nh == 0, 0.0, nh)
        le = jnp.where(ne == 0, 0.0, le)
        ne = jnp.where(ne == 0, 0.0, ne)
        nt = jnp.where(ne + nh == 0, 1.0, ne + nh)
        loss = (le + lam * lh) / nt
    else:
        loss = jnp.sum(jnp.where(mv, nll0, 0.0)) / jnp.sum(mv.astype(jnp.float32))
    return loss, tval, tidx, hn_ratio


if __name__ == "__main__":
    key = jax.random.PRNGKey(0)
    N, D = 32, 32
    fvec = jax.random.normal(key, (N, D), dtype=jnp.float32)
    # 8 classes x 4 samples each -> every row has positives and negatives
    labels = jnp.array([i // 4 for i in range(N)], dtype=jnp.int32)

    # multi-tile path (grid=(4,), exercises per-tile partial-sum outputs)
    for method in ("sct", "hn", "shn"):
        outs = jax.block_until_ready(
            sct_loss(fvec, labels, method=method, lam=1.0, tile_rows=8))
        ref = _reference(fvec, labels, method=method, lam=1.0)
        assert jnp.allclose(outs[0], ref[0], atol=1e-5), (method, outs[0], ref[0])
        assert jnp.allclose(outs[1], ref[1], atol=1e-5), method
        assert jnp.array_equal(outs[2], ref[2]), method
        assert jnp.allclose(outs[3], ref[3], atol=1e-6), method

    # single-tile path (auto tile size -> grid=(1,))
    outs = jax.block_until_ready(sct_loss(fvec, labels, method="sct", lam=1.0))
    ref = _reference(fvec, labels, method="sct", lam=1.0)
    assert jnp.allclose(outs[0], ref[0], atol=1e-5), (outs[0], ref[0])
    assert jnp.allclose(outs[1], ref[1], atol=1e-5)
    assert jnp.array_equal(outs[2], ref[2])
    assert jnp.allclose(outs[3], ref[3], atol=1e-6)

    # bf16-MXU path (reduced precision -> only check it runs and stays finite)
    outs_bf16 = jax.block_until_ready(
        sct_loss(fvec, labels, method="sct", lam=1.0, tile_rows=8,
                 compute_dtype=jnp.bfloat16))
    assert bool(jnp.isfinite(outs_bf16[0])), outs_bf16[0]

    print("KERNEL_OK")
</pallas_src>

<mosaic_0001>
module attributes {stable_mosaic.version = 11 : i64} {
  func.func @_sct_tile_kernel(%arg0: i32, %arg1: memref<8x32xf32, #tpu.memory_space<vmem>>, %arg2: memref<32x32xf32, #tpu.memory_space<vmem>>, %arg3: memref<1x32xi32, #tpu.memory_space<vmem>>, %arg4: memref<8x1xi32, #tpu.memory_space<vmem>>, %arg5: memref<8x128xf32, #tpu.memory_space<vmem>>, %arg6: memref<8x128xi32, #tpu.memory_space<vmem>>, %arg7: memref<1x8x128xf32, #tpu.memory_space<vmem>>) attributes {dimension_semantics = [#tpu.dimension_semantics<parallel>], iteration_bounds = array<i64: 4>, scalar_prefetch = 0 : i64, scratch_operands = 0 : i64, tpu.core_type = #tpu.core_type<tc>, window_params = [{transform_indices = @transform_0, window_bounds = array<i64: 8, 32>}, {pipeline_mode = #tpu.pipeline_mode<synchronous>, transform_indices = @transform_1, window_bounds = array<i64: 32, 32>}, {pipeline_mode = #tpu.pipeline_mode<synchronous>, transform_indices = @transform_2, window_bounds = array<i64: 1, 32>}, {transform_indices = @transform_3, window_bounds = array<i64: 8, 1>}, {transform_indices = @transform_4, window_bounds = array<i64: 8, 128>}, {transform_indices = @transform_5, window_bounds = array<i64: 8, 128>}, {transform_indices = @transform_6, window_bounds = array<i64: 1, 8, 128>}]} {
    %c8_i32 = arith.constant 8 : i32
    %0 = arith.muli %arg0, %c8_i32 : i32
    %c0 = arith.constant 0 : index
    %c0_0 = arith.constant 0 : index
    %1 = vector.load %arg1[%c0, %c0_0] : memref<8x32xf32, #tpu.memory_space<vmem>>, vector<8x32xf32>
    %c0_1 = arith.constant 0 : index
    %c0_2 = arith.constant 0 : index
    %2 = vector.load %arg2[%c0_1, %c0_2] : memref<32x32xf32, #tpu.memory_space<vmem>>, vector<32x32xf32>
    %cst = arith.constant dense<0.000000e+00> : vector<8x32xf32>
    %3 = tpu.matmul %1, %2, %cst {dimension_numbers = #tpu.dot_dimension_numbers<[1], [0], [0], [1], [0, 0, 1, 1], [], []>} : vector<8x32xf32>, vector<32x32xf32>, vector<8x32xf32> -> vector<8x32xf32>
    %4 = tpu.iota {dimensions = array<i32: 1>} : vector<8x32xi32>
    %5 = tpu.iota {dimensions = array<i32: 0>} : vector<8x1xi32>
    %6 = vector.broadcast %0 : i32 to vector<8x1xi32>
    %7 = arith.addi %6, %5 : vector<8x1xi32>
    %8 = vector.broadcast %7 : vector<8x1xi32> to vector<8x32xi32>
    %9 = arith.cmpi eq, %4, %8 : vector<8x32xi32>
    %cst_3 = arith.constant -1.000000e+00 : f32
    %10 = vector.broadcast %cst_3 : f32 to vector<8x32xf32>
    %11 = arith.select %9, %10, %3 : vector<8x32xi1>, vector<8x32xf32>
    %c0_4 = arith.constant 0 : index
    %c0_5 = arith.constant 0 : index
    %12 = vector.load %arg4[%c0_4, %c0_5] : memref<8x1xi32, #tpu.memory_space<vmem>>, vector<8x1xi32>
    %c0_6 = arith.constant 0 : index
    %c0_7 = arith.constant 0 : index
    %13 = vector.load %arg3[%c0_6, %c0_7] : memref<1x32xi32, #tpu.memory_space<vmem>>, vector<1x32xi32>
    %14 = vector.broadcast %12 : vector<8x1xi32> to vector<8x32xi32>
    %15 = vector.broadcast %13 : vector<1x32xi32> to vector<8x32xi32>
    %16 = arith.cmpi eq, %14, %15 : vector<8x32xi32>
    %cst_8 = arith.constant dense<true> : vector<8x32xi1>
    %17 = arith.xori %16, %cst_8 : vector<8x32xi1>
    %cst_9 = arith.constant 0.999899983 : f32
    %18 = vector.broadcast %cst_9 : f32 to vector<8x32xf32>
    %19 = arith.cmpf ogt, %11, %18 : vector<8x32xf32>
    %20 = arith.ori %17, %19 : vector<8x32xi1>
    %cst_10 = arith.constant -1.000000e+00 : f32
    %21 = vector.broadcast %cst_10 : f32 to vector<8x32xf32>
    %22 = arith.select %20, %21, %11 : vector<8x32xi1>, vector<8x32xf32>
    %cst_11 = arith.constant dense<0xFF800000> : vector<8xf32>
    %23 = vector.multi_reduction <maximumf>, %22, %cst_11 [1] : vector<8x32xf32> to vector<8xf32>
    %24 = vector.shape_cast %23 : vector<8xf32> to vector<8x1xf32>
    %25 = vector.broadcast %24 : vector<8x1xf32> to vector<8x32xf32>
    %26 = arith.cmpf oeq, %22, %25 : vector<8x32xf32>
    %c32_i32 = arith.constant 32 : i32
    %27 = vector.broadcast %c32_i32 : i32 to vector<8x32xi32>
    %28 = arith.select %26, %4, %27 : vector<8x32xi1>, vector<8x32xi32>
    %cst_12 = arith.constant dense<2147483647> : vector<8xi32>
    %29 = vector.multi_reduction <minsi>, %28, %cst_12 [1] : vector<8x32xi32> to vector<8xi32>
    %30 = vector.shape_cast %29 : vector<8xi32> to vector<8x1xi32>
    %cst_13 = arith.constant -1.000000e+00 : f32
    %31 = vector.broadcast %cst_13 : f32 to vector<8x1xf32>
    %32 = arith.cmpf ogt, %24, %31 : vector<8x1xf32>
    %33 = vector.extract_strided_slice %11 {offsets = [0, 0], sizes = [8, 1], strides = [1, 1]} : vector<8x32xf32> to vector<8x1xf32>
    %34 = arith.select %32, %24, %33 : vector<8x1xi1>, vector<8x1xf32>
    %cst_14 = arith.constant -1.000000e+00 : f32
    %35 = vector.broadcast %cst_14 : f32 to vector<8x1xf32>
    %36 = arith.cmpf ogt, %24, %35 : vector<8x1xf32>
    %cst_15 = arith.constant 1.000000e+00 : f32
    %37 = vector.broadcast %cst_15 : f32 to vector<8x1xf32>
    %38 = arith.cmpf olt, %24, %37 : vector<8x1xf32>
    %39 = arith.andi %36, %38 : vector<8x1xi1>
    %cst_16 = arith.constant -1.000000e+00 : f32
    %40 = vector.broadcast %cst_16 : f32 to vector<8x32xf32>
    %41 = arith.select %16, %40, %11 : vector<8x32xi1>, vector<8x32xf32>
    %cst_17 = arith.constant dense<0xFF800000> : vector<8xf32>
    %42 = vector.multi_reduction <maximumf>, %41, %cst_17 [1] : vector<8x32xf32> to vector<8xf32>
    %43 = vector.shape_cast %42 : vector<8xf32> to vector<8x1xf32>
    %44 = vector.broadcast %43 : vector<8x1xf32> to vector<8x32xf32>
    %45 = arith.cmpf oeq, %41, %44 : vector<8x32xf32>
    %c32_i32_18 = arith.constant 32 : i32
    %46 = vector.broadcast %c32_i32_18 : i32 to vector<8x32xi32>
    %47 = arith.select %45, %4, %46 : vector<8x32xi1>, vector<8x32xi32>
    %cst_19 = arith.constant dense<2147483647> : vector<8xi32>
    %48 = vector.multi_reduction <minsi>, %47, %cst_19 [1] : vector<8x32xi32> to vector<8xi32>
    %49 = vector.shape_cast %48 : vector<8xi32> to vector<8x1xi32>
    %cst_20 = arith.constant -1.000000e+00 : f32
    %50 = vector.broadcast %cst_20 : f32 to vector<8x1xf32>
    %51 = arith.cmpf ogt, %43, %50 : vector<8x1xf32>
    %52 = vector.extract_strided_slice %11 {offsets = [0, 0], sizes = [8, 1], strides = [1, 1]} : vector<8x32xf32> to vector<8x1xf32>
    %53 = arith.select %51, %43, %52 : vector<8x1xi1>, vector<8x1xf32>
    %cst_21 = arith.constant -1.000000e+00 : f32
    %54 = vector.broadcast %cst_21 : f32 to vector<8x1xf32>
    %55 = arith.cmpf ogt, %43, %54 : vector<8x1xf32>
    %cst_22 = arith.constant 1.000000e+00 : f32
    %56 = vector.broadcast %cst_22 : f32 to vector<8x1xf32>
    %57 = arith.cmpf olt, %43, %56 : vector<8x1xf32>
    %58 = arith.andi %55, %57 : vector<8x1xi1>
    %59 = arith.andi %39, %58 : vector<8x1xi1>
    %60 = arith.cmpf ogt, %53, %34 : vector<8x1xf32>
    %cst_23 = arith.constant 8.000000e-01 : f32
    %61 = vector.broadcast %cst_23 : f32 to vector<8x1xf32>
    %62 = arith.cmpf ogt, %53, %61 : vector<8x1xf32>
    %63 = arith.ori %60, %62 : vector<8x1xi1>
    %64 = arith.andi %63, %59 : vector<8x1xi1>
    %65 = arith.cmpf olt, %53, %34 : vector<8x1xf32>
    %cst_24 = arith.constant 8.000000e-01 : f32
    %66 = vector.broadcast %cst_24 : f32 to vector<8x1xf32>
    %67 = arith.cmpf olt, %53, %66 : vector<8x1xf32>
    %68 = arith.andi %65, %67 : vector<8x1xi1>
    %69 = arith.andi %68, %59 : vector<8x1xi1>
    %cst_25 = arith.constant 1.000000e-01 : f32
    %70 = vector.broadcast %cst_25 : f32 to vector<8x1xf32>
    %71 = arith.divf %34, %70 : vector<8x1xf32>
    %cst_26 = arith.constant 1.000000e-01 : f32
    %72 = vector.broadcast %cst_26 : f32 to vector<8x1xf32>
    %73 = arith.divf %53, %72 : vector<8x1xf32>
    %74 = arith.maximumf %71, %73 : vector<8x1xf32>
    %75 = arith.subf %71, %74 : vector<8x1xf32>
    %76 = math.exp %75 : vector<8x1xf32>
    %77 = arith.subf %73, %74 : vector<8x1xf32>
    %78 = math.exp %77 : vector<8x1xf32>
    %79 = arith.addf %76, %78 : vector<8x1xf32>
    %80 = math.log %79 : vector<8x1xf32>
    %81 = arith.addf %74, %80 : vector<8x1xf32>
    %82 = arith.subf %81, %71 : vector<8x1xf32>
    %c0_27 = arith.constant 0 : index
    %c0_28 = arith.constant 0 : index
    %83 = vector.load %arg5[%c0_27, %c0_28] : memref<8x128xf32, #tpu.memory_space<vmem>>, vector<8x1xf32>
    tpu.vector_store %arg5[%c0_27, %c0_28], %34 {strides = array<i32>} : memref<8x128xf32, #tpu.memory_space<vmem>>, vector<8x1xf32>,
    %c0_29 = arith.constant 0 : index
    %c1 = arith.constant 1 : index
    %84 = vector.load %arg5[%c0_29, %c1] : memref<8x128xf32, #tpu.memory_space<vmem>>, vector<8x1xf32>
    tpu.vector_store %arg5[%c0_29, %c1], %53 {strides = array<i32>} : memref<8x128xf32, #tpu.memory_space<vmem>>, vector<8x1xf32>,
    %c0_30 = arith.constant 0 : index
    %c0_31 = arith.constant 0 : index
    %85 = vector.load %arg6[%c0_30, %c0_31] : memref<8x128xi32, #tpu.memory_space<vmem>>, vector<8x1xi32>
    tpu.vector_store %arg6[%c0_30, %c0_31], %30 {strides = array<i32>} : memref<8x128xi32, #tpu.memory_space<vmem>>, vector<8x1xi32>,
    %c0_32 = arith.constant 0 : index
    %c1_33 = arith.constant 1 : index
    %86 = vector.load %arg6[%c0_32, %c1_33] : memref<8x128xi32, #tpu.memory_space<vmem>>, vector<8x1xi32>
    tpu.vector_store %arg6[%c0_32, %c1_33], %49 {strides = array<i32>} : memref<8x128xi32, #tpu.memory_space<vmem>>, vector<8x1xi32>,
    %cst_34 = arith.constant 0.000000e+00 : f32
    %87 = vector.broadcast %cst_34 : f32 to vector<8x1xf32>
    %88 = arith.select %64, %53, %87 : vector<8x1xi1>, vector<8x1xf32>
    %89 = vector.shape_cast %88 : vector<8x1xf32> to vector<1x8x1xf32>
    %cst_35 = arith.constant dense<0.000000e+00> : vector<1xf32>
    %90 = vector.multi_reduction <add>, %89, %cst_35 [1, 2] : vector<1x8x1xf32> to vector<1xf32>
    %91 = vector.shape_cast %90 : vector<1xf32> to vector<1x1x1xf32>
    %92 = vector.extract %91[0, 0, 0] : f32 from vector<1x1x1xf32>
    %93 = vector.broadcast %92 : f32 to vector<1x1xf32>
    %94 = arith.extui %64 : vector<8x1xi1> to vector<8x1xi32>
    %95 = arith.sitofp %94 : vector<8x1xi32> to vector<8x1xf32>
    %96 = vector.shape_cast %95 : vector<8x1xf32> to vector<1x8x1xf32>
    %cst_36 = arith.constant dense<0.000000e+00> : vector<1xf32>
    %97 = vector.multi_reduction <add>, %96, %cst_36 [1, 2] : vector<1x8x1xf32> to vector<1xf32>
    %98 = vector.shape_cast %97 : vector<1xf32> to vector<1x1x1xf32>
    %99 = vector.extract %98[0, 0, 0] : f32 from vector<1x1x1xf32>
    %100 = vector.broadcast %99 : f32 to vector<1x1xf32>
    %cst_37 = arith.constant 0.000000e+00 : f32
    %101 = vector.broadcast %cst_37 : f32 to vector<8x1xf32>
    %102 = arith.select %69, %82, %101 : vector<8x1xi1>, vector<8x1xf32>
    %103 = vector.shape_cast %102 : vector<8x1xf32> to vector<1x8x1xf32>
    %cst_38 = arith.constant dense<0.000000e+00> : vector<1xf32>
    %104 = vector.multi_reduction <add>, %103, %cst_38 [1, 2] : vector<1x8x1xf32> to vector<1xf32>
    %105 = vector.shape_cast %104 : vector<1xf32> to vector<1x1x1xf32>
    %106 = vector.extract %105[0, 0, 0] : f32 from vector<1x1x1xf32>
    %107 = vector.broadcast %106 : f32 to vector<1x1xf32>
    %108 = arith.extui %69 : vector<8x1xi1> to vector<8x1xi32>
    %109 = arith.sitofp %108 : vector<8x1xi32> to vector<8x1xf32>
    %110 = vector.shape_cast %109 : vector<8x1xf32> to vector<1x8x1xf32>
    %cst_39 = arith.constant dense<0.000000e+00> : vector<1xf32>
    %111 = vector.multi_reduction <add>, %110, %cst_39 [1, 2] : vector<1x8x1xf32> to vector<1xf32>
    %112 = vector.shape_cast %111 : vector<1xf32> to vector<1x1x1xf32>
    %113 = vector.extract %112[0, 0, 0] : f32 from vector<1x1x1xf32>
    %114 = vector.broadcast %113 : f32 to vector<1x1xf32>
    %cst_40 = arith.constant 0.000000e+00 : f32
    %115 = vector.broadcast %cst_40 : f32 to vector<8x1xf32>
    %116 = arith.select %59, %82, %115 : vector<8x1xi1>, vector<8x1xf32>
    %117 = vector.shape_cast %116 : vector<8x1xf32> to vector<1x8x1xf32>
    %cst_41 = arith.constant dense<0.000000e+00> : vector<1xf32>
    %118 = vector.multi_reduction <add>, %117, %cst_41 [1, 2] : vector<1x8x1xf32> to vector<1xf32>
    %119 = vector.shape_cast %118 : vector<1xf32> to vector<1x1x1xf32>
    %120 = vector.extract %119[0, 0, 0] : f32 from vector<1x1x1xf32>
    %121 = vector.broadcast %120 : f32 to vector<1x1xf32>
    %122 = arith.extui %59 : vector<8x1xi1> to vector<8x1xi32>
    %123 = arith.sitofp %122 : vector<8x1xi32> to vector<8x1xf32>
    %124 = vector.shape_cast %123 : vector<8x1xf32> to vector<1x8x1xf32>
    %cst_42 = arith.constant dense<0.000000e+00> : vector<1xf32>
    %125 = vector.multi_reduction <add>, %124, %cst_42 [1, 2] : vector<1x8x1xf32> to vector<1xf32>
    %126 = vector.shape_cast %125 : vector<1xf32> to vector<1x1x1xf32>
    %127 = vector.extract %126[0, 0, 0] : f32 from vector<1x1x1xf32>
    %128 = vector.broadcast %127 : f32 to vector<1x1xf32>
    %129 = arith.cmpf ogt, %53, %34 : vector<8x1xf32>
    %130 = arith.andi %129, %59 : vector<8x1xi1>
    %131 = arith.extui %130 : vector<8x1xi1> to vector<8x1xi32>
    %132 = arith.sitofp %131 : vector<8x1xi32> to vector<8x1xf32>
    %133 = vector.shape_cast %132 : vector<8x1xf32> to vector<1x8x1xf32>
    %cst_43 = arith.constant dense<0.000000e+00> : vector<1xf32>
    %134 = vector.multi_reduction <add>, %133, %cst_43 [1, 2] : vector<1x8x1xf32> to vector<1xf32>
    %135 = vector.shape_cast %134 : vector<1xf32> to vector<1x1x1xf32>
    %136 = vector.extract %135[0, 0, 0] : f32 from vector<1x1x1xf32>
    %137 = vector.broadcast %136 : f32 to vector<1x1xf32>
    %138 = tpu.iota {dimensions = array<i32: 0>} : vector<8x128xi32>
    %cst_44 = arith.constant 0.000000e+00 : f32
    %139 = vector.broadcast %cst_44 : f32 to vector<8x128xf32>
    %c0_i32 = arith.constant 0 : i32
    %140 = vector.broadcast %c0_i32 : i32 to vector<8x128xi32>
    %141 = arith.cmpi eq, %138, %140 : vector<8x128xi32>
    %142 = vector.shape_cast %93 : vector<1x1xf32> to vector<1x1xf32>
    %143 = vector.broadcast %142 : vector<1x1xf32> to vector<8x128xf32>
    %144 = arith.select %141, %143, %139 : vector<8x128xi1>, vector<8x128xf32>
    %c1_i32 = arith.constant 1 : i32
    %145 = vector.broadcast %c1_i32 : i32 to vector<8x128xi32>
    %146 = arith.cmpi eq, %138, %145 : vector<8x128xi32>
    %147 = vector.shape_cast %100 : vector<1x1xf32> to vector<1x1xf32>
    %148 = vector.broadcast %147 : vector<1x1xf32> to vector<8x128xf32>
    %149 = arith.select %146, %148, %144 : vector<8x128xi1>, vector<8x128xf32>
    %c2_i32 = arith.constant 2 : i32
    %150 = vector.broadcast %c2_i32 : i32 to vector<8x128xi32>
    %151 = arith.cmpi eq, %138, %150 : vector<8x128xi32>
    %152 = vector.shape_cast %107 : vector<1x1xf32> to vector<1x1xf32>
    %153 = vector.broadcast %152 : vector<1x1xf32> to vector<8x128xf32>
    %154 = arith.select %151, %153, %149 : vector<8x128xi1>, vector<8x128xf32>
    %c3_i32 = arith.constant 3 : i32
    %155 = vector.broadcast %c3_i32 : i32 to vector<8x128xi32>
    %156 = arith.cmpi eq, %138, %155 : vector<8x128xi32>
    %157 = vector.shape_cast %114 : vector<1x1xf32> to vector<1x1xf32>
    %158 = vector.broadcast %157 : vector<1x1xf32> to vector<8x128xf32>
    %159 = arith.select %156, %158, %154 : vector<8x128xi1>, vector<8x128xf32>
    %c4_i32 = arith.constant 4 : i32
    %160 = vector.broadcast %c4_i32 : i32 to vector<8x128xi32>
    %161 = arith.cmpi eq, %138, %160 : vector<8x128xi32>
    %162 = vector.shape_cast %121 : vector<1x1xf32> to vector<1x1xf32>
    %163 = vector.broadcast %162 : vector<1x1xf32> to vector<8x128xf32>
    %164 = arith.select %161, %163, %159 : vector<8x128xi1>, vector<8x128xf32>
    %c5_i32 = arith.constant 5 : i32
    %165 = vector.broadcast %c5_i32 : i32 to vector<8x128xi32>
    %166 = arith.cmpi eq, %138, %165 : vector<8x128xi32>
    %167 = vector.shape_cast %128 : vector<1x1xf32> to vector<1x1xf32>
    %168 = vector.broadcast %167 : vector<1x1xf32> to vector<8x128xf32>
    %169 = arith.select %166, %168, %164 : vector<8x128xi1>, vector<8x128xf32>
    %c6_i32 = arith.constant 6 : i32
    %170 = vector.broadcast %c6_i32 : i32 to vector<8x128xi32>
    %171 = arith.cmpi eq, %138, %170 : vector<8x128xi32>
    %172 = vector.shape_cast %137 : vector<1x1xf32> to vector<1x1xf32>
    %173 = vector.broadcast %172 : vector<1x1xf32> to vector<8x128xf32>
    %174 = arith.select %171, %173, %169 : vector<8x128xi1>, vector<8x128xf32>
    %175 = vector.shape_cast %174 : vector<8x128xf32> to vector<1x8x128xf32>
    %c0_45 = arith.constant 0 : index
    %c0_46 = arith.constant 0 : index
    %c0_47 = arith.constant 0 : index
    %176 = vector.load %arg7[%c0_45, %c0_46, %c0_47] : memref<1x8x128xf32, #tpu.memory_space<vmem>>, vector<1x8x128xf32>
    tpu.vector_store %arg7[%c0_45, %c0_46, %c0_47], %175 {strides = array<i32>} : memref<1x8x128xf32, #tpu.memory_space<vmem>>, vector<1x8x128xf32>,
    return
  }
  func.func @transform_0(%arg0: i32) -> (i32, i32) {
    %c0_i32 = arith.constant 0 : i32
    %c0_i32_0 = arith.constant 0 : i32
    return %arg0, %c0_i32 : i32, i32
  }
  func.func @transform_1(%arg0: i32) -> (i32, i32) {
    %c0_i32 = arith.constant 0 : i32
    %c0_i32_0 = arith.constant 0 : i32
    %c0_i32_1 = arith.constant 0 : i32
    return %c0_i32, %c0_i32_0 : i32, i32
  }
  func.func @transform_2(%arg0: i32) -> (i32, i32) {
    %c0_i32 = arith.constant 0 : i32
    %c0_i32_0 = arith.constant 0 : i32
    %c0_i32_1 = arith.constant 0 : i32
    return %c0_i32, %c0_i32_0 : i32, i32
  }
  func.func @transform_3(%arg0: i32) -> (i32, i32) {
    %c0_i32 = arith.constant 0 : i32
    %c0_i32_0 = arith.constant 0 : i32
    return %arg0, %c0_i32 : i32, i32
  }
  func.func @transform_4(%arg0: i32) -> (i32, i32) {
    %c0_i32 = arith.constant 0 : i32
    %c0_i32_0 = arith.constant 0 : i32
    return %arg0, %c0_i32 : i32, i32
  }
  func.func @transform_5(%arg0: i32) -> (i32, i32) {
    %c0_i32 = arith.constant 0 : i32
    %c0_i32_0 = arith.constant 0 : i32
    return %arg0, %c0_i32 : i32, i32
  }
  func.func @transform_6(%arg0: i32) -> (i32, i32, i32) {
    %c0_i32 = arith.constant 0 : i32
    %c0_i32_0 = arith.constant 0 : i32
    %c0_i32_1 = arith.constant 0 : i32
    return %arg0, %c0_i32, %c0_i32_0 : i32, i32, i32
  }
}

</mosaic_0001>

<llo_original>
// kernel: tpu_custom_call.1
$region0: #{tpu_custom_call.1}
  #allocation0 [shape = 'u32[]', space=smem, size = 0x4, offset = 0x4, fixed_abs, tag = 'smem constant byte address 0x4 - core index']
  #allocation1 [shape = 'u32[72,128]{1,0:T(1,128)}', space=vmem, size = 0x9000, scoped, tag = 'internal scratch']
  %s0 = inlined_call_operand.vmem [shape: f32[32,32], index: 0, kind: input, shape index: {}]
  %s1 = inlined_call_operand.hbm [shape: f32[32,32], index: 1, kind: input, shape index: {}]
  %s2 = inlined_call_operand.vmem [shape: s32[1,32], index: 2, kind: input, shape index: {}]
  %s3 = inlined_call_operand.vmem [shape: s32[32,1], index: 3, kind: input, shape index: {}]
  %s4 = inlined_call_operand.hbm [shape: f32[32,128], index: 4, kind: output, shape index: {0}]
  %s5 = inlined_call_operand.hbm [shape: s32[32,128], index: 5, kind: output, shape index: {1}]
  %s6 = inlined_call_operand.hbm [shape: f32[4,8,128], index: 6, kind: output, shape index: {2}]
  %7 = xla_tuple %s4, %s5, %s6
  %s8 = sld [smem:[#allocation0]]
  $region69: #{tpu_custom_call.1} parent=0
    _
  %s10 = ssub.s32 1, %s8
  %s11 = scalar_select 0, %s10, %s8
  $region1: #{tpu_custom_call.1} parent=0
    #allocation2 [shape = 'u8[16384]{0}', space=vmem, size = 0x4000, scoped, tag = 'input window, operand 1, single buffered']
    #allocation3 [shape = 's32[2]{0}', space=sflag, size = 0x8, scoped, tag = 'scoped memory for tpu_custom_call.1']
    #allocation4 [shape = 's32[2]{0}', space=sflag, size = 0x8, scoped, tag = 'scoped memory for tpu_custom_call.1']
    #allocation5 [shape = 'u8[8192]{0}', space=vmem, size = 0x2000, scoped, tag = 'output window, operand 0']
    #allocation6 [shape = 'u8[8192]{0}', space=vmem, size = 0x2000, scoped, tag = 'output window, operand 1']
    #allocation7 [shape = 's32[2]{0}', space=sflag, size = 0x8, scoped, tag = 'scoped memory for tpu_custom_call.1']
    #allocation8 [shape = 'u8[8192]{0}', space=vmem, size = 0x2000, scoped, tag = 'output window, operand 2']
    %12 = vsyncpa [#allocation3], 0
    %13 = vsyncpa [#allocation4], 0
    %s14 = scalar_lea.sflag [#allocation4], 1
    %15 = vsyncpa %s14, 0
    %16 = vsyncpa [#allocation7], 0
    %s17 = scalar_lea.sflag [#allocation7], 1
    %18 = vsyncpa %s17, 0
    loop: start=0, step=1, limit=6
    $region2: #{tpu_custom_call.1} parent=1 // loop_pre_header
      _
    $region3: #{tpu_custom_call.1} parent=1 // loop_header
      %s20 = sphi 0, %s24
      %p21 = scmp.ge.s32.totalorder %s20, 6
      %s30 = sphi 0, %s32
      %s33 = sphi 0, %s30
      %s34 = sphi 0, %s33
      %s50 = sphi 0, %s34
      %s54 = sphi 0, %s54
      %s56 = sphi 0, %s54
      %s57 = sphi 0, %s56
      %s71 = sphi 0, %s57
      %s75 = sphi 0, %s75
      %s77 = sphi 0, %s75
      %s78 = sphi 0, %s77
      %s92 = sphi 0, %s78
      %s98 = sphi 0, %s100
      %s101 = sphi 0, %s98
      %s102 = sphi 0, %s101
      %s118 = sphi 0, %s102
      %s124 = sphi 0, %s126
      %s127 = sphi 0, %s124
      %s128 = sphi 0, %s127
      %s144 = sphi 0, %s128
      %s150 = sphi 0, %s152
      %s153 = sphi 0, %s150
      %s154 = sphi 0, %s153
      %s170 = sphi 0, %s154
      %s176 = sphi 0, %s178
      %s179 = sphi 0, %s176
      %s180 = sphi 0, %s179
      %s196 = sphi 0, %s180
    $region4: #{tpu_custom_call.1} parent=1 // loop_header_branch
      %23 = sbr.rel (%p21) target = $region8
    $region5: #{tpu_custom_call.1} parent=1 // loop_body
      %s25 = ssub.s32 %s20, 1
      %s26 = ssub.s32 %s20, 2
      %s27 = sadd.s32 %s20, 1
      %s28 = ssub.s32 %s20, %s27
      %p29 = scmp.eq.s32.totalorder %s28, 0
      %s31 = sadd.s32 %s30, 1
      %s32 = scalar_select %p29, %s30, %s31
      %p35 = pneg %p29
      %p36 = scmp.eq.s32.totalorder %s20, 3
      %p37 = por %p35, %p36
      %p38 = scmp.ne.s32.totalorder %s30, %s33
      %p39 = scmp.eq.s32.totalorder %s20, 0
      %p40 = por %p38, %p39
      %p41 = scmp.ne.s32.totalorder %s30, %s33
      %p42 = scmp.eq.s32.totalorder %s25, 3
      %p43 = por %p41, %p42
      %p44 = scmp.ne.s32.totalorder %s33, %s34
      %p45 = scmp.eq.s32.totalorder %s25, 0
      %p46 = por %p44, %p45
      %p47 = scmp.ne.s32.totalorder %s33, %s34
      %p48 = scmp.eq.s32.totalorder %s26, 3
      %p49 = por %p47, %p48
      %p51 = scmp.ne.s32.totalorder %s34, %s50
      %p52 = scmp.eq.s32.totalorder %s26, 0
      %p53 = por %p51, %p52
      %s55 = sadd.s32 %s54, 1
      %p58 = scmp.eq.s32.totalorder %s20, 3
      %p59 = scmp.ne.s32.totalorder %s54, %s56
      %p60 = scmp.eq.s32.totalorder %s20, 0
      %p61 = por %p59, %p60
      %p62 = scmp.ne.s32.totalorder %s54, %s56
      %p63 = scmp.eq.s32.totalorder %s25, 3
      %p64 = por %p62, %p63
      %p65 = scmp.ne.s32.totalorder %s56, %s57
      %p66 = scmp.eq.s32.totalorder %s25, 0
      %p67 = por %p65, %p66
      %p68 = scmp.ne.s32.totalorder %s56, %s57
      %p69 = scmp.eq.s32.totalorder %s26, 3
      %p70 = por %p68, %p69
      %p72 = scmp.ne.s32.totalorder %s57, %s71
      %p73 = scmp.eq.s32.totalorder %s26, 0
      %p74 = por %p72, %p73
      %s76 = sadd.s32 %s75, 1
      %p79 = scmp.eq.s32.totalorder %s20, 3
      %p80 = scmp.ne.s32.totalorder %s75, %s77
      %p81 = scmp.eq.s32.totalorder %s20, 0
      %p82 = por %p80, %p81
      %p83 = scmp.ne.s32.totalorder %s75, %s77
      %p84 = scmp.eq.s32.totalorder %s25, 3
      %p85 = por %p83, %p84
      %p86 = scmp.ne.s32.totalorder %s77, %s78
      %p87 = scmp.eq.s32.totalorder %s25, 0
      %p88 = por %p86, %p87
      %p89 = scmp.ne.s32.totalorder %s77, %s78
      %p90 = scmp.eq.s32.totalorder %s26, 3
      %p91 = por %p89, %p90
      %p93 = scmp.ne.s32.totalorder %s78, %s92
      %p94 = scmp.eq.s32.totalorder %s26, 0
      %p95 = por %p93, %p94
      %s96 = ssub.s32 %s20, %s27
      %p97 = scmp.eq.s32.totalorder %s96, 0
      %s99 = sadd.s32 %s98, 1
      %s100 = scalar_select %p97, %s98, %s99
      %p103 = pneg %p97
      %p104 = scmp.eq.s32.totalorder %s20, 3
      %p105 = por %p103, %p104
      %p106 = scmp.ne.s32.totalorder %s98, %s101
      %p107 = scmp.eq.s32.totalorder %s20, 0
      %p108 = por %p106, %p107
      %p109 = scmp.ne.s32.totalorder %s98, %s101
      %p110 = scmp.eq.s32.totalorder %s25, 3
      %p111 = por %p109, %p110
      %p112 = scmp.ne.s32.totalorder %s101, %s102
      %p113 = scmp.eq.s32.totalorder %s25, 0
      %p114 = por %p112, %p113
      %p115 = scmp.ne.s32.totalorder %s101, %s102
      %p116 = scmp.eq.s32.totalorder %s26, 3
      %p117 = por %p115, %p116
      %p119 = scmp.ne.s32.totalorder %s102, %s118
      %p120 = scmp.eq.s32.totalorder %s26, 0
      %p121 = por %p119, %p120
      %s122 = ssub.s32 %s20, %s27
      %p123 = scmp.eq.s32.totalorder %s122, 0
      %s125 = sadd.s32 %s124, 1
      %s126 = scalar_select %p123, %s124, %s125
      %p129 = pneg %p123
      %p130 = scmp.eq.s32.totalorder %s20, 3
      %p131 = por %p129, %p130
      %p132 = scmp.ne.s32.totalorder %s124, %s127
      %p133 = scmp.eq.s32.totalorder %s20, 0
      %p134 = por %p132, %p133
      %p135 = scmp.ne.s32.totalorder %s124, %s127
      %p136 = scmp.eq.s32.totalorder %s25, 3
      %p137 = por %p135, %p136
      %p138 = scmp.ne.s32.totalorder %s127, %s128
      %p139 = scmp.eq.s32.totalorder %s25, 0
      %p140 = por %p138, %p139
      %p141 = scmp.ne.s32.totalorder %s127, %s128
      %p142 = scmp.eq.s32.totalorder %s26, 3
      %p143 = por %p141, %p142
      %p145 = scmp.ne.s32.totalorder %s128, %s144
      %p146 = scmp.eq.s32.totalorder %s26, 0
      %p147 = por %p145, %p146
      %s148 = ssub.s32 %s20, %s27
      %p149 = scmp.eq.s32.totalorder %s148, 0
      %s151 = sadd.s32 %s150, 1
      %s152 = scalar_select %p149, %s150, %s151
      %p155 = pneg %p149
      %p156 = scmp.eq.s32.totalorder %s20, 3
      %p157 = por %p155, %p156
      %p158 = scmp.ne.s32.totalorder %s150, %s153
      %p159 = scmp.eq.s32.totalorder %s20, 0
      %p160 = por %p158, %p159
      %p161 = scmp.ne.s32.totalorder %s150, %s153
      %p162 = scmp.eq.s32.totalorder %s25, 3
      %p163 = por %p161, %p162
      %p164 = scmp.ne.s32.totalorder %s153, %s154
      %p165 = scmp.eq.s32.totalorder %s25, 0
      %p166 = por %p164, %p165
      %p167 = scmp.ne.s32.totalorder %s153, %s154
      %p168 = scmp.eq.s32.totalorder %s26, 3
      %p169 = por %p167, %p168
      %p171 = scmp.ne.s32.totalorder %s154, %s170
      %p172 = scmp.eq.s32.totalorder %s26, 0
      %p173 = por %p171, %p172
      %s174 = ssub.s32 %s20, %s27
      %p175 = scmp.eq.s32.totalorder %s174, 0
      %s177 = sadd.s32 %s176, 1
      %s178 = scalar_select %p175, %s176, %s177
      %p181 = pneg %p175
      %p182 = scmp.eq.s32.totalorder %s20, 3
      %p183 = por %p181, %p182
      %p184 = scmp.ne.s32.totalorder %s176, %s179
      %p185 = scmp.eq.s32.totalorder %s20, 0
      %p186 = por %p184, %p185
      %p187 = scmp.ne.s32.totalorder %s176, %s179
      %p188 = scmp.eq.s32.totalorder %s25, 3
      %p189 = por %p187, %p188
      %p190 = scmp.ne.s32.totalorder %s179, %s180
      %p191 = scmp.eq.s32.totalorder %s25, 0
      %p192 = por %p190, %p191
      %p193 = scmp.ne.s32.totalorder %s179, %s180
      %p194 = scmp.eq.s32.totalorder %s26, 3
      %p195 = por %p193, %p194
      %p197 = scmp.ne.s32.totalorder %s180, %s196
      %p198 = scmp.eq.s32.totalorder %s26, 0
      %p199 = por %p197, %p198
      %p200 = scmp.le.s32.totalorder 1, %s20
      %p201 = scmp.lt.s32.totalorder %s20, 5
      %p202 = pnand %p200, %p201
      %p203 = pneg %p202
      // Predicated region
      $region9: #{tpu_custom_call.1} parent=5 // pred_check
        _
      $region10: #{tpu_custom_call.1} parent=5 // pred_check_branch
        %205 = sbr.rel (%p202) target = $region12
      $region11: #{tpu_custom_call.1} parent=5 // pred_region
        %s206 = ssub.s32 %s20, 1
        // Predicated region
        $region13: #{tpu_custom_call.1} parent=11 // pred_check
          %p207 = pneg %p67
        $region14: #{tpu_custom_call.1} parent=11 // pred_check_branch
          %209 = sbr.rel (%p207) target = $region16
        $region15: #{tpu_custom_call.1} parent=11 // pred_region
          %211 = vsyncadd [#allocation3], 0
          %s212 = sshll.u32 %s1, 4
          %s213 = int_to_ptr.hbm [resolvable:$true] %s212
          %s214 = sshll.u32 [#allocation2], 4
          %s215 = int_to_ptr.vmem [resolvable:$true] %s214
          %220 = dma.hbm_to_vmem [thread:$0]  %s213, 512, %s215, [#allocation3], 128, 128, 8
        $region16: #{tpu_custom_call.1} parent=11 // pred_fallthru
          _
        // Predicated region
        $region17: #{tpu_custom_call.1} parent=11 // pred_check
          %p221 = pneg %p88
        $region18: #{tpu_custom_call.1} parent=11 // pred_check_branch
          %223 = sbr.rel (%p221) target = $region20
        $region19: #{tpu_custom_call.1} parent=11 // pred_region
          _
        $region20: #{tpu_custom_call.1} parent=11 // pred_fallthru
          _
      $region12: #{tpu_custom_call.1} parent=5 // pred_fallthru
        _
      %p224 = scmp.lt.s32.totalorder %s20, 4
      // Predicated region
      $region21: #{tpu_custom_call.1} parent=5 // pred_check
        %p225 = pneg %p224
      $region22: #{tpu_custom_call.1} parent=5 // pred_check_branch
        %227 = sbr.rel (%p225) target = $region24
      $region23: #{tpu_custom_call.1} parent=5 // pred_region
        // Predicated region
        $region25: #{tpu_custom_call.1} parent=23 // pred_check
          %p228 = pneg %p40
        $region26: #{tpu_custom_call.1} parent=23 // pred_check_branch
          %230 = sbr.rel (%p228) target = $region28
        $region27: #{tpu_custom_call.1} parent=23 // pred_region
          %p231 = scmp.lt.s32.totalorder %s20, 3
          %s232 = scalar_select %p231, %s20, 3
          %s233 = smul.addr %s232, 8
          %s234 = scalar_lea.vmem %s0, %s233
        $region28: #{tpu_custom_call.1} parent=23 // pred_fallthru
          _
        // Predicated region
        $region29: #{tpu_custom_call.1} parent=23 // pred_check
          %p235 = pneg %p108
        $region30: #{tpu_custom_call.1} parent=23 // pred_check_branch
          %237 = sbr.rel (%p235) target = $region32
        $region31: #{tpu_custom_call.1} parent=23 // pred_region
          %p238 = scmp.lt.s32.totalorder %s20, 3
          %s239 = scalar_select %p238, %s20, 3
          %s240 = smul.addr %s239, 8
          %s241 = scalar_lea.vmem %s3, %s240
        $region32: #{tpu_custom_call.1} parent=23 // pred_fallthru
          _
      $region24: #{tpu_custom_call.1} parent=5 // pred_fallthru
        _
      %p242 = scmp.le.s32.totalorder 1, %s20
      %p243 = scmp.lt.s32.totalorder %s20, 5
      %p244 = pnand %p242, %p243
      %p245 = pneg %p244
      // Predicated region
      $region33: #{tpu_custom_call.1} parent=5 // pred_check
        _
      $region34: #{tpu_custom_call.1} parent=5 // pred_check_branch
        %247 = sbr.rel (%p244) target = $region36
      $region35: #{tpu_custom_call.1} parent=5 // pred_region
        %s248 = ssub.s32 %s20, 1
        // Predicated region
        $region37: #{tpu_custom_call.1} parent=35 // pred_check
          %p249 = pneg %p67
        $region38: #{tpu_custom_call.1} parent=35 // pred_check_branch
          %251 = sbr.rel (%p249) target = $region40
        $region39: #{tpu_custom_call.1} parent=35 // pred_region
          %253 = dma.done [#allocation3], 512
        $region40: #{tpu_custom_call.1} parent=35 // pred_fallthru
          _
        %p254 = scmp.lt.s32.totalorder %s25, 3
        %s255 = scalar_select %p254, %s25, 3
        %s256 = smul.addr %s255, 8
        %s257 = scalar_lea.vmem %s0, %s256
        %p258 = pneg %p46
        %p259 = pneg %p43
        %p260 = pneg %p67
        %p261 = pneg %p64
        %p262 = pneg %p88
        %p263 = pneg %p85
        %p264 = scmp.lt.s32.totalorder %s25, 3
        %s265 = scalar_select %p264, %s25, 3
        %s266 = smul.addr %s265, 8
        %s267 = scalar_lea.vmem %s3, %s266
        %p268 = pneg %p114
        %p269 = pneg %p111
        %p270 = pneg %p140
        %p271 = pneg %p137
        %s272 = sand.u32 %s127, 1
        %s273 = scalar_lea.sflag [#allocation4], %s272
        %s274 = sand.u32 %s127, 1
        %s275 = smul.addr %s274, 8
        %s276 = scalar_lea.vmem [#allocation5], %s275
        %p277 = pneg %p166
        %p278 = pneg %p163
        %s279 = sand.u32 %s25, 1
        %s280 = scalar_lea.sflag [#allocation7], %s279
        %s281 = sand.u32 %s153, 1
        %s282 = smul.addr %s281, 8
        %s283 = scalar_lea.vmem [#allocation6], %s282
        %p284 = pneg %p192
        %p285 = pneg %p189
        %s286 = sand.u32 %s25, 1
        %s287 = scalar_lea.sflag [#allocation7], %s286
        %s288 = sand.u32 %s179, 1
        %s289 = smul.addr %s288, 8
        %s290 = scalar_lea.vmem [#allocation8], %s289
        %p291 = scmp.lt.s32.totalorder %s25, 3
        %s292 = scalar_select %p291, %s25, 3
        %s293 = smul.addr %s292, 8
        %s294 = scalar_lea.vmem %s0, %s293
        %p295 = scmp.lt.s32.totalorder %s25, 3
        %s296 = scalar_select %p295, %s25, 3
        %s297 = smul.addr %s296, 8
        %s298 = scalar_lea.vmem %s3, %s297
        %s299 = smul.u32 %s25, 8
        %v300 = vld [vmem:[%s294] sm:$0xff]
        %v301 = vld [vmem:[#allocation2] sm:$0xff]
        %v302 = vld [vmem:[#allocation2 + $0x8] sm:$0xff]
        %v303 = vld [vmem:[#allocation2 + $0x10] sm:$0xff]
        %v304 = vld [vmem:[#allocation2 + $0x18] sm:$0xff]
        %vm305 = vcmask 261120
        %v307 = vsel %vm305, %v300, 0
        %309 = vmatpush.msra.mxu0 0.0
        %310 = vmatpush.msra.mxu0 0.0
        %311 = vmatpush.msra.mxu0 0.0
        %312 = vmatpush.msra.mxu0 0.0
        %313 = vmatpush.msra.mxu0 0.0
        %314 = vmatpush.msra.mxu0 0.0
        %315 = vmatpush.msra.mxu0 0.0
        %316 = vmatpush.msra.mxu0 0.0
        %317 = vmatpush.msra.mxu0 0.0
        %318 = vmatpush.msra.mxu0 0.0
        %319 = vmatpush.msra.mxu0 0.0
        %320 = vmatpush.msra.mxu0 0.0
        %321 = vmatpush.msra.mxu0 %v304
        %322 = vmatpush.msra.mxu0 %v303
        %323 = vmatpush.msra.mxu0 %v302
        %324 = vmatpush.msra.mxu0 %v301
        %325 = vmatmul.f32.gmra.mxu0 %v307
        %v326 = vpop.f32.mrf.mxu0
        %v327 = vadd.f32 0.0, %v326
        %328 = vdwg.mxu0
        %v329 = vlaneseq
        %v330 = vand.u32 %v329, 127
        %v331 = vlaneseq
        %v332 = vshrl.u32 %v331, 7
        %v333 = vstv %s299
        %v334 = vadd.s32 %v333, %v332
        %vm335 = vcmp.eq.s32.totalorder %v330, %v334
        %v336 = vsel %vm335, -1.0, %v327
        %v337 = vld [vmem:[%s298] sm:$0xff]
        %v338 = vld [vmem:[%s2] sm:$0x1]
        %339 = vset.pattern.permute.xlu0 0
        %340 = vperm.xlu0 %339, %v337
        %v341 = vpop.permute.xlu0 %340
        %v342 = vperm.slane %v338, 0
        %vm343 = vcmp.eq.s32.totalorder %v341, %v342
        %vm344 = vmxor %vm343, 1
        %vm345 = vcmp.gt.f32.partialorder %v336, 0.9999
        %vm346 = vmor %vm344, %vm345
        %v347 = vsel %vm346, -1.0, %v336
        %v348 = vsel %vm305, %v347, -inf
        %349 = vmax.xlane.f32.xlu0 %v348
        %v350 = vpop.xlane.xlu0 %349
        %vm351 = vcmp.eq.f32.partialorder %v347, %v350
        %v352 = vsel %vm351, %v330, 32
        %v353 = vsel %vm305, %v352, 2147483647
        %v354 = vand.u32 %v353, 65535
        %v355 = vshra.s32 %v353, 16
        %v356 = vcvt.s32.f32 %v354
        %v357 = vcvt.s32.f32 %v355
        %358 = vmin.xlane.f32.xlu0 %v357
        %v359 = vpop.xlane.xlu0 %358
        %vm360 = vcmp.eq.f32.partialorder %v357, %v359
        %v361 = vsel %vm360, %v356, inf
        %362 = vmin.xlane.f32.xlu0 %v361
        %v363 = vpop.xlane.xlu0 %362
        %v364 = vcvt.f32.s32 %v363
        %v365 = vcvt.f32.s32 %v359
        %v366 = vshll.u32 %v365, 16
        %v367 = vadd.s32 %v366, %v364
        %vm368 = vcmp.gt.f32.partialorder %v350, -1.0
        %v369 = vsel %vm368, %v350, %v336
        %vm370 = vcmp.lt.f32.partialorder %v350, 1.0
        %vm371 = vmand %vm368, %vm370
        %v372 = vsel %vm343, -1.0, %v336
        %v373 = vsel %vm305, %v372, -inf
        %374 = vmax.xlane.f32.xlu0 %v373
        %v375 = vpop.xlane.xlu0 %374
        %vm376 = vcmp.eq.f32.partialorder %v372, %v375
        %v377 = vsel %vm376, %v330, 32
        %v378 = vsel %vm305, %v377, 2147483647
        %v379 = vand.u32 %v378, 65535
        %v380 = vshra.s32 %v378, 16
        %v381 = vcvt.s32.f32 %v379
        %v382 = vcvt.s32.f32 %v380
        %383 = vmin.xlane.f32.xlu0 %v382
        %v384 = vpop.xlane.xlu0 %383
        %vm385 = vcmp.eq.f32.partialorder %v382, %v384
        %v386 = vsel %vm385, %v381, inf
        %387 = vmin.xlane.f32.xlu0 %v386
        %v388 = vpop.xlane.xlu0 %387
        %v389 = vcvt.f32.s32 %v388
        %v390 = vcvt.f32.s32 %v384
        %v391 = vshll.u32 %v390, 16
        %v392 = vadd.s32 %v391, %v389
        %vm393 = vcmp.gt.f32.partialorder %v375, -1.0
        %v394 = vsel %vm393, %v375, %v336
        %vm395 = vcmp.lt.f32.partialorder %v375, 1.0
        %vm396 = vmand %vm393, %vm395
        %vm397 = vmand %vm371, %vm396
        %vm398 = vcmp.gt.f32.partialorder %v394, %v369
        %vm399 = vcmp.gt.f32.partialorder %v394, 0.8
        %vm400 = vmor %vm398, %vm399
        %vm401 = vmand %vm400, %vm397
        %vm402 = vcmp.lt.f32.partialorder %v394, %v369
        %vm403 = vcmp.lt.f32.partialorder %v394, 0.8
        %vm404 = vmand %vm402, %vm403
        %vm405 = vmand %vm404, %vm397
        %v406 = vrcp.pop 0.1
        %v407 = vmul.f32 0.1, %v406
        %v408 = vsub.f32 1.0, %v407
        %v409 = vmul.f32 %v406, %v408
        %v410 = vadd.f32 %v406, %v409
        %vm411 = vweird.f32 %v406
        %v412 = vsel %vm411, %v406, %v410
        %v413 = vmul.f32 %v369, %v412
        %v414 = vmul.f32 %v394, %v412
        %v415 = vmax.f32 %v413, %v414
        %v416 = vsub.f32 %v413, %v415
        %v417 = vmul.f32 %v416, 1.442695
        %v418 = vpow.pop %v417
        %v419 = vsub.f32 %v414, %v415
        %v420 = vmul.f32 %v419, 1.442695
        %v421 = vpow.pop %v420
        %v422 = vadd.f32 %v418, %v421
        %v423 = vlog2.pop %v422
        %v424 = vmul.f32 %v423, 0.6931472
        %v425 = vadd.f32 %v415, %v424
        %v426 = vsub.f32 %v425, %v413
        %vm427 = vcmask 7168
        %428 = vst.msk [vmem:[%s276] sm:$0xff] %vm427, %v369
        %430 = vrot.lane.b32.xlu0 %v394, 1
        %v431 = vpop.permute.xlu0 %430
        %vm433 = vcmask 15368
        %434 = vst.msk [vmem:[%s276] sm:$0xff] %vm433, %v431
        %435 = vst.msk [vmem:[%s283] sm:$0xff] %vm427, %v367
        %436 = vst.msk [vmem:[%s283] sm:$0xff] %vm433, %v392
        %v437 = vsel %vm401, %v394, 0.0
        %v438 = vsel %vm427, %v437, 0.0
        %439 = vadd.xlane.f32.xlu0 %v438
        %v440 = vpop.xlane.xlu0 %439
        %v441 = vrot.slane %v440, 4
        %v442 = vadd.f32 %v440, %v441
        %v443 = vrot.slane %v442, 2
        %v444 = vadd.f32 %v442, %v443
        %v445 = vrot.slane %v444, 1
        %v446 = vadd.f32 %v444, %v445
        %s447 = vtos %v446
        %v448 = vsel %vm401, 1, 0
        %v449 = vcvt.s32.f32 %v448
        %v450 = vsel %vm427, %v449, 0.0
        %451 = vadd.xlane.f32.xlu0 %v450
        %v452 = vpop.xlane.xlu0 %451
        %v453 = vrot.slane %v452, 4
        %v454 = vadd.f32 %v452, %v453
        %v455 = vrot.slane %v454, 2
        %v456 = vadd.f32 %v454, %v455
        %v457 = vrot.slane %v456, 1
        %v458 = vadd.f32 %v456, %v457
        %s459 = vtos %v458
        %v460 = vsel %vm405, %v426, 0.0
        %v461 = vsel %vm427, %v460, 0.0
        %462 = vadd.xlane.f32.xlu0 %v461
        %v463 = vpop.xlane.xlu0 %462
        %v464 = vrot.slane %v463, 4
        %v465 = vadd.f32 %v463, %v464
        %v466 = vrot.slane %v465, 2
        %v467 = vadd.f32 %v465, %v466
        %v468 = vrot.slane %v467, 1
        %v469 = vadd.f32 %v467, %v468
        %s470 = vtos %v469
        %v471 = vsel %vm405, 1, 0
        %v472 = vcvt.s32.f32 %v471
        %v473 = vsel %vm427, %v472, 0.0
        %474 = vadd.xlane.f32.xlu0 %v473
        %v475 = vpop.xlane.xlu0 %474
        %v476 = vrot.slane %v475, 4
        %v477 = vadd.f32 %v475, %v476
        %v478 = vrot.slane %v477, 2
        %v479 = vadd.f32 %v477, %v478
        %v480 = vrot.slane %v479, 1
        %v481 = vadd.f32 %v479, %v480
        %s482 = vtos %v481
        %v483 = vsel %vm397, %v426, 0.0
        %v484 = vsel %vm427, %v483, 0.0
        %485 = vadd.xlane.f32.xlu0 %v484
        %v486 = vpop.xlane.xlu0 %485
        %v487 = vrot.slane %v486, 4
        %v488 = vadd.f32 %v486, %v487
        %v489 = vrot.slane %v488, 2
        %v490 = vadd.f32 %v488, %v489
        %v491 = vrot.slane %v490, 1
        %v492 = vadd.f32 %v490, %v491
        %s493 = vtos %v492
        %v494 = vsel %vm397, 1, 0
        %v495 = vcvt.s32.f32 %v494
        %v496 = vsel %vm427, %v495, 0.0
        %497 = vadd.xlane.f32.xlu0 %v496
        %v498 = vpop.xlane.xlu0 %497
        %v499 = vrot.slane %v498, 4
        %v500 = vadd.f32 %v498, %v499
        %v501 = vrot.slane %v500, 2
        %v502 = vadd.f32 %v500, %v501
        %v503 = vrot.slane %v502, 1
        %v504 = vadd.f32 %v502, %v503
        %s505 = vtos %v504
        %vm506 = vmand %vm398, %vm397
        %v507 = vsel %vm506, 1, 0
        %v508 = vcvt.s32.f32 %v507
        %v509 = vsel %vm427, %v508, 0.0
        %510 = vadd.xlane.f32.xlu0 %v509
        %v511 = vpop.xlane.xlu0 %510
        %v512 = vrot.slane %v511, 4
        %v513 = vadd.f32 %v511, %v512
        %v514 = vrot.slane %v513, 2
        %v515 = vadd.f32 %v513, %v514
        %v516 = vrot.slane %v515, 1
        %v517 = vadd.f32 %v515, %v516
        %s518 = vtos %v517
        %vm519 = vcmp.eq.s32.totalorder %v332, 0
        %v520 = vstv %s447
        %v521 = vsel %vm519, %v520, 0.0
        %vm522 = vcmp.eq.s32.totalorder %v332, 1
        %v523 = vstv %s459
        %v524 = vsel %vm522, %v523, %v521
        %vm525 = vcmp.eq.s32.totalorder %v332, 2
        %v526 = vstv %s470
        %v527 = vsel %vm525, %v526, %v524
        %vm528 = vcmp.eq.s32.totalorder %v332, 3
        %v529 = vstv %s482
        %v530 = vsel %vm528, %v529, %v527
        %vm531 = vcmp.eq.s32.totalorder %v332, 4
        %v532 = vstv %s493
        %v533 = vsel %vm531, %v532, %v530
        %vm534 = vcmp.eq.s32.totalorder %v332, 5
        %v535 = vstv %s505
        %v536 = vsel %vm534, %v535, %v533
        %vm537 = vcmp.eq.s32.totalorder %v332, 6
        %v538 = vstv %s518
        %v539 = vsel %vm537, %v538, %v536
        %540 = vst [vmem:[%s290] sm:$0xff] %v539
        %s541 = sand.u32 %s127, 1
        %s542 = scalar_lea.sflag [#allocation4], %s541
        %s543 = sand.u32 %s127, 1
        %s544 = smul.addr %s543, 8
        %s545 = scalar_lea.vmem [#allocation5], %s544
        %s546 = sand.u32 %s25, 1
        %s547 = scalar_lea.sflag [#allocation7], %s546
        %s548 = sand.u32 %s153, 1
        %s549 = smul.addr %s548, 8
        %s550 = scalar_lea.vmem [#allocation6], %s549
        %s551 = sand.u32 %s25, 1
        %s552 = scalar_lea.sflag [#allocation7], %s551
        %s553 = sand.u32 %s179, 1
        %s554 = smul.addr %s553, 8
        %s555 = scalar_lea.vmem [#allocation8], %s554
        // Predicated region
        $region41: #{tpu_custom_call.1} parent=35 // pred_check
          %p556 = pneg %p137
        $region42: #{tpu_custom_call.1} parent=35 // pred_check_branch
          %558 = sbr.rel (%p556) target = $region44
        $region43: #{tpu_custom_call.1} parent=35 // pred_region
          %560 = vsyncadd %s542, 0
          %s561 = smul.addr %s25, 8
          %s562 = scalar_lea.hbm %s4, %s561
          %s564 = sshll.u32 %s545, 4
          %s565 = int_to_ptr.vmem [resolvable:$true] %s564
          %s566 = sshll.u32 %s562, 4
          %s567 = int_to_ptr.hbm [resolvable:$true] %s566
          %569 = dma.vmem_to_hbm [thread:$0]  %s565, 128, %s567, %s542
        $region44: #{tpu_custom_call.1} parent=35 // pred_fallthru
          _
        // Predicated region
        $region45: #{tpu_custom_call.1} parent=35 // pred_check
          %p570 = pneg %p163
        $region46: #{tpu_custom_call.1} parent=35 // pred_check_branch
          %572 = sbr.rel (%p570) target = $region48
        $region47: #{tpu_custom_call.1} parent=35 // pred_region
          %574 = vsyncadd %s547, 0
          %s575 = smul.addr %s25, 8
          %s576 = scalar_lea.hbm %s5, %s575
          %s578 = sshll.u32 %s550, 4
          %s579 = int_to_ptr.vmem [resolvable:$true] %s578
          %s580 = sshll.u32 %s576, 4
          %s581 = int_to_ptr.hbm [resolvable:$true] %s580
          %583 = dma.vmem_to_hbm [thread:$0]  %s579, 128, %s581, %s547
        $region48: #{tpu_custom_call.1} parent=35 // pred_fallthru
          _
        // Predicated region
        $region49: #{tpu_custom_call.1} parent=35 // pred_check
          %p584 = pneg %p189
        $region50: #{tpu_custom_call.1} parent=35 // pred_check_branch
          %586 = sbr.rel (%p584) target = $region52
        $region51: #{tpu_custom_call.1} parent=35 // pred_region
          %588 = vsyncadd %s552, 0
          %s589 = smul.addr %s25, 8
          %s590 = scalar_lea.hbm %s6, %s589
          %s592 = sshll.u32 %s555, 4
          %s593 = int_to_ptr.vmem [resolvable:$true] %s592
          %s594 = sshll.u32 %s590, 4
          %s595 = int_to_ptr.hbm [resolvable:$true] %s594
          %597 = dma.vmem_to_hbm [thread:$0]  %s593, 128, %s595, %s552
        $region52: #{tpu_custom_call.1} parent=35 // pred_fallthru
          _
      $region36: #{tpu_custom_call.1} parent=5 // pred_fallthru
        _
      %p598 = scmp.le.s32.totalorder 2, %s20
      // Predicated region
      $region53: #{tpu_custom_call.1} parent=5 // pred_check
        %p599 = pneg %p598
      $region54: #{tpu_custom_call.1} parent=5 // pred_check_branch
        %601 = sbr.rel (%p599) target = $region56
      $region55: #{tpu_custom_call.1} parent=5 // pred_region
        %s602 = ssub.s32 %s20, 2
        // Predicated region
        $region57: #{tpu_custom_call.1} parent=55 // pred_check
          %p603 = pneg %p143
        $region58: #{tpu_custom_call.1} parent=55 // pred_check_branch
          %605 = sbr.rel (%p603) target = $region60
        $region59: #{tpu_custom_call.1} parent=55 // pred_region
          %s606 = sand.u32 %s128, 1
          %s607 = scalar_lea.sflag [#allocation4], %s606
          %s608 = sand.u32 %s128, 1
          %s609 = smul.addr %s608, 8
          %s610 = scalar_lea.vmem [#allocation5], %s609
          %612 = dma.done %s607, 128
        $region60: #{tpu_custom_call.1} parent=55 // pred_fallthru
          _
        // Predicated region
        $region61: #{tpu_custom_call.1} parent=55 // pred_check
          %p613 = pneg %p169
        $region62: #{tpu_custom_call.1} parent=55 // pred_check_branch
          %615 = sbr.rel (%p613) target = $region64
        $region63: #{tpu_custom_call.1} parent=55 // pred_region
          %s616 = sand.u32 %s26, 1
          %s617 = scalar_lea.sflag [#allocation7], %s616
          %s618 = sand.u32 %s154, 1
          %s619 = smul.addr %s618, 8
          %s620 = scalar_lea.vmem [#allocation6], %s619
          %622 = dma.done %s617, 128
        $region64: #{tpu_custom_call.1} parent=55 // pred_fallthru
          _
        // Predicated region
        $region65: #{tpu_custom_call.1} parent=55 // pred_check
          %p623 = pneg %p195
        $region66: #{tpu_custom_call.1} parent=55 // pred_check_branch
          %625 = sbr.rel (%p623) target = $region68
        $region67: #{tpu_custom_call.1} parent=55 // pred_region
          %s626 = sand.u32 %s26, 1
          %s627 = scalar_lea.sflag [#allocation7], %s626
          %s628 = sand.u32 %s180, 1
          %s629 = smul.addr %s628, 8
          %s630 = scalar_lea.vmem [#allocation8], %s629
          %632 = dma.done %s627, 128
        $region68: #{tpu_custom_call.1} parent=55 // pred_fallthru
          _
      $region56: #{tpu_custom_call.1} parent=5 // pred_fallthru
        _
    $region6: #{tpu_custom_call.1} parent=1 // loop_footer
      %s24 = sadd.s32 1, %s20
    $region7: #{tpu_custom_call.1} parent=1 // loop_footer_branch
      %19 = sbr.rel target = $region3
    $region8: #{tpu_custom_call.1} parent=1 // loop_exit
      _
    %633 = vsyncpa [#allocation3], 1
    %s634 = scalar_lea.sflag [#allocation3], 1
    %635 = vsyncpa %s634, 1
    %636 = vsyncpa [#allocation4], 1
    %s637 = scalar_lea.sflag [#allocation4], 1
    %638 = vsyncpa %s637, 1
    %639 = vsyncpa [#allocation7], 1
    %s640 = scalar_lea.sflag [#allocation7], 1
    %641 = vsyncpa %s640, 1

</llo_original>
